<compile_context>
chip_gen: v7x
topology: tpu7x:2x2x1
jax: 0.10.0
libtpu: 0.0.40
codegen_flags: <defaults>
</compile_context>

<pallas_src>
import math

import jax
import jax.numpy as jnp
from jax.experimental import pallas as pl
from jax.experimental.pallas import tpu as pltpu


def _round_up(v, m):
    return ((v + m - 1) // m) * m


def _pe_add_kernel(x_ref, pe_ref, o_ref):
    # x_ref / o_ref : (tile_s, B*D)      pe_ref : (tile_s, D), float32
    n = x_ref.shape[1]
    d = pe_ref.shape[1]
    b = n // d                                   # static Python int
    pe = pe_ref[...]
    if b > 1:
        # Replicate the per-position encoding across the batch along the lane axis
        # (static concat -> vreg copies; sin is never evaluated in-kernel).
        pe = jnp.concatenate([pe] * b, axis=1)
    o_ref[...] = (x_ref[...].astype(jnp.float32) + pe).astype(o_ref.dtype)


def _sinusoid_table(seq_len, d_model):
    """(seq_len, d_model) float32 table, identical to the PyTorch module's `pe` buffer."""
    position = jnp.arange(seq_len, dtype=jnp.float32)[:, None]
    div_term = jnp.exp(
        jnp.arange(0, d_model, 2, dtype=jnp.float32) * (-math.log(10000.0) / d_model)
    )
    angles = position * div_term                                   # (S, ceil(D/2))
    pe = jnp.zeros((seq_len, d_model), jnp.float32)
    pe = pe.at[:, 0::2].set(jnp.sin(angles))
    pe = pe.at[:, 1::2].set(jnp.cos(angles[:, : d_model // 2]))    # odd-D safe
    return pe


def positional_encoding(x, *, tile_bytes=None, donate_input=False):
    """x: (S, B, D) array. Returns x + pe[:S] (dropout = identity, eval mode)."""
    S, B, D = x.shape
    N = B * D
    itemsize = jnp.dtype(x.dtype).itemsize

    x2 = x.reshape(S, N)                     # free contiguous view, lane-dense output
    pe = _sinusoid_table(S, D)               # tiny (S, D) f32 side stream (1/B of x)

    # dtype-native sublane packing: 8 rows (f32), 16 (bf16), 32 (int8/fp8).
    sub = max(8, 32 // max(itemsize, 1))

    # Generation-aware sizing: bigger tiles on 128-MiB-VMEM parts (v5e/v6e), smaller on
    # 64-MiB parts (v7x).
    try:
        phys_vmem = pltpu.get_tpu_info().vmem_capacity_bytes
    except Exception:                         # conservative fallback
        phys_vmem = 64 << 20
    big_vmem = phys_vmem >= (128 << 20)
    if tile_bytes is None:
        tile_bytes = (8 << 20) if big_vmem else (4 << 20)
    vmem_budget = (72 << 20) if big_vmem else (40 << 20)

    row_bytes = N * itemsize
    # Per-row VMEM cost of one grid step, double-buffered: x-in, x-out, pe-in.
    per_row_vmem = 2 * (2 * row_bytes + 4 * D)

    if S <= sub:
        tile_s = S                            # single full block (full-dim exemption)
    else:
        tile_s = (tile_bytes // max(row_bytes, 1)) // sub * sub
        tile_s = min(tile_s, (vmem_budget // max(per_row_vmem, 1)) // sub * sub)
        tile_s = max(sub, tile_s)
        # Keep >= 2 grid steps when S allows so multi-TC chips (v7x) split the work.
        tile_s = min(tile_s, _round_up((S + 1) // 2, sub))

    grid = (pl.cdiv(S, tile_s),)
    vmem_limit = int(min(max(tile_s * per_row_vmem + (4 << 20), 32 << 20),
                         vmem_budget + (8 << 20)))

    extra = {}
    if donate_input:
        # Reuse x's HBM buffer for the output (saves the extra output allocation and a
        # potential copy around the call). Only safe if the caller does not reuse x.
        extra["input_output_aliases"] = {0: 0}

    out2 = pl.pallas_call(
        _pe_add_kernel,
        out_shape=jax.ShapeDtypeStruct((S, N), x.dtype),
        grid=grid,
        in_specs=[
            pl.BlockSpec((tile_s, N), lambda i: (i, 0)),
            pl.BlockSpec((tile_s, D), lambda i: (i, 0)),
        ],
        out_specs=pl.BlockSpec((tile_s, N), lambda i: (i, 0)),
        compiler_params=pltpu.CompilerParams(
            dimension_semantics=("parallel",),
            vmem_limit_bytes=vmem_limit,
        ),
        **extra,
    )(x2, pe)

    return out2.reshape(S, B, D)


def make_pe_table(d_model, max_len=5000, dtype=jnp.float32):
    """Reference buffer, shape (max_len, 1, d_model), matching the PyTorch module."""
    return _sinusoid_table(max_len, d_model)[:, None, :].astype(dtype)


if __name__ == "__main__":
    key = jax.random.PRNGKey(0)

    # Small shape consistent with the module: (seq, batch, d_model).
    seq, batch, d_model = 8, 2, 32
    x = jax.random.normal(key, (seq, batch, d_model), dtype=jnp.float32)
    out = jax.block_until_ready(positional_encoding(x))
    ref = x + make_pe_table(d_model, max_len=64)[:seq]
    assert out.shape == (seq, batch, d_model)
    assert jnp.allclose(out, ref, atol=1e-5, rtol=1e-5), "mismatch vs reference (small)"

    # Multi-tile f32 path with a ragged last block (forces several grid steps and the
    # masked-write path on the final partial tile).
    seq2, batch2, d_model2 = 44, 2, 128
    xa = jax.random.normal(jax.random.PRNGKey(1), (seq2, batch2, d_model2), jnp.float32)
    outa = jax.block_until_ready(positional_encoding(xa, tile_bytes=8 * 1024))
    refa = xa + make_pe_table(d_model2, max_len=64)[:seq2]
    assert jnp.allclose(outa, refa, atol=1e-5, rtol=1e-5), "mismatch vs reference (tiled)"

    # bf16 path (exercises the 16-row sublane rounding).
    seq3, batch3, d_model3 = 40, 2, 128
    xb = jax.random.normal(jax.random.PRNGKey(2), (seq3, batch3, d_model3), jnp.float32)
    xb = xb.astype(jnp.bfloat16)
    outb = jax.block_until_ready(positional_encoding(xb, tile_bytes=16 * 1024))
    refb = (xb.astype(jnp.float32) + make_pe_table(d_model3, max_len=64)[:seq3]
            ).astype(jnp.bfloat16)
    assert jnp.allclose(outb.astype(jnp.float32), refb.astype(jnp.float32),
                        atol=2e-2, rtol=2e-2), "mismatch vs reference (bf16)"

    print("KERNEL_OK")
</pallas_src>

<mosaic_0001>
module attributes {stable_mosaic.version = 11 : i64} {
  func.func @_pe_add_kernel(%arg0: i32, %arg1: memref<8x64xf32, #tpu.memory_space<vmem>>, %arg2: memref<8x32xf32, #tpu.memory_space<vmem>>, %arg3: memref<8x64xf32, #tpu.memory_space<vmem>>) attributes {dimension_semantics = [#tpu.dimension_semantics<parallel>], iteration_bounds = array<i64: 1>, scalar_prefetch = 0 : i64, scratch_operands = 0 : i64, tpu.core_type = #tpu.core_type<tc>, window_params = [{transform_indices = @transform_0, window_bounds = array<i64: 8, 64>}, {transform_indices = @transform_1, window_bounds = array<i64: 8, 32>}, {transform_indices = @transform_2, window_bounds = array<i64: 8, 64>}]} {
    %c0 = arith.constant 0 : index
    %c0_0 = arith.constant 0 : index
    %0 = vector.load %arg2[%c0, %c0_0] : memref<8x32xf32, #tpu.memory_space<vmem>>, vector<8x32xf32>
    %1 = tpu.concatenate %0, %0 in 1 : vector<8x32xf32>, vector<8x32xf32> -> vector<8x64xf32>
    %c0_1 = arith.constant 0 : index
    %c0_2 = arith.constant 0 : index
    %2 = vector.load %arg1[%c0_1, %c0_2] : memref<8x64xf32, #tpu.memory_space<vmem>>, vector<8x64xf32>
    %3 = arith.addf %2, %1 : vector<8x64xf32>
    %c0_3 = arith.constant 0 : index
    %c0_4 = arith.constant 0 : index
    %4 = vector.load %arg3[%c0_3, %c0_4] : memref<8x64xf32, #tpu.memory_space<vmem>>, vector<8x64xf32>
    tpu.vector_store %arg3[%c0_3, %c0_4], %3 {strides = array<i32>} : memref<8x64xf32, #tpu.memory_space<vmem>>, vector<8x64xf32>,
    return
  }
  func.func @transform_0(%arg0: i32) -> (i32, i32) {
    %c0_i32 = arith.constant 0 : i32
    %c0_i32_0 = arith.constant 0 : i32
    return %arg0, %c0_i32 : i32, i32
  }
  func.func @transform_1(%arg0: i32) -> (i32, i32) {
    %c0_i32 = arith.constant 0 : i32
    %c0_i32_0 = arith.constant 0 : i32
    return %arg0, %c0_i32 : i32, i32
  }
  func.func @transform_2(%arg0: i32) -> (i32, i32) {
    %c0_i32 = arith.constant 0 : i32
    %c0_i32_0 = arith.constant 0 : i32
    return %arg0, %c0_i32 : i32, i32
  }
}

</mosaic_0001>

<llo_original>
// kernel: tpu_custom_call.1
$region0: #{tpu_custom_call.1}
  #allocation0 [shape = 'u32[]', space=smem, size = 0x4, offset = 0x4, fixed_abs, tag = 'smem constant byte address 0x4 - core index']
  #allocation1 [shape = 'u32[144,128]{1,0:T(1,128)}', space=vmem, size = 0x12000, scoped, tag = 'internal scratch']
  %s0 = inlined_call_operand.hbm [shape: f32[8,64], index: 0, kind: input, shape index: {}]
  %s1 = inlined_call_operand.hbm [shape: f32[8,32], index: 1, kind: input, shape index: {}]
  %s2 = inlined_call_operand.hbm [shape: f32[8,64], index: 2, kind: output, shape index: {}]
  %s3 = sld [smem:[#allocation0]]
  $region26: #{tpu_custom_call.1} parent=0
    _
  %s5 = ssub.s32 1, %s3
  %s6 = scalar_select 0, %s5, %s3
  $region1: #{tpu_custom_call.1} parent=0
    #allocation2 [shape = 'u8[4096]{0}', space=vmem, size = 0x1000, scoped, tag = 'input window, operand 0, single buffered']
    #allocation3 [shape = 's32[1]{0}', space=sflag, size = 0x4, scoped, tag = 'scoped memory for tpu_custom_call.1']
    #allocation4 [shape = 's32[1]{0}', space=sflag, size = 0x4, scoped, tag = 'scoped memory for tpu_custom_call.1']
    #allocation5 [shape = 'u8[4096]{0}', space=vmem, size = 0x1000, scoped, tag = 'input window, operand 1, single buffered']
    #allocation6 [shape = 's32[1]{0}', space=sflag, size = 0x4, scoped, tag = 'scoped memory for tpu_custom_call.1']
    #allocation7 [shape = 'u8[4096]{0}', space=vmem, size = 0x1000, scoped, tag = 'output window, operand 0, single buffered']
    %7 = vsyncpa [#allocation3], 0
    %8 = vsyncpa [#allocation6], 0
    %9 = vsyncpa [#allocation4], 0
    // Predicated region
    $region2: #{tpu_custom_call.1} parent=1 // pred_check
      _
    $region3: #{tpu_custom_call.1} parent=1 // pred_check_branch
      %11 = sbr.rel (0) target = $region5
    $region4: #{tpu_custom_call.1} parent=1 // pred_region
      %s13 = ssub.s32 128, 128
      %14 = vsyncadd [#allocation3], %s13
      %s16 = sshll.u32 [#allocation2], 4
      %s17 = int_to_ptr.vmem [resolvable:$true] %s16
      %19 = dma.hbm_to_vmem [thread:$0]  %s0, 128, %s17, [#allocation3]
    $region5: #{tpu_custom_call.1} parent=1 // pred_fallthru
      _
    // Predicated region
    $region6: #{tpu_custom_call.1} parent=1 // pred_check
      _
    $region7: #{tpu_custom_call.1} parent=1 // pred_check_branch
      %21 = sbr.rel (0) target = $region9
    $region8: #{tpu_custom_call.1} parent=1 // pred_region
      %s23 = ssub.s32 128, 128
      %24 = vsyncadd [#allocation6], %s23
      %s26 = sshll.u32 [#allocation5], 4
      %s27 = int_to_ptr.vmem [resolvable:$true] %s26
      %29 = dma.hbm_to_vmem [thread:$0]  %s1, 128, %s27, [#allocation6]
    $region9: #{tpu_custom_call.1} parent=1 // pred_fallthru
      _
    // Predicated region
    $region10: #{tpu_custom_call.1} parent=1 // pred_check
      _
    $region11: #{tpu_custom_call.1} parent=1 // pred_check_branch
      %31 = sbr.rel (0) target = $region13
    $region12: #{tpu_custom_call.1} parent=1 // pred_region
      %32 = dma.done [#allocation3], 128
    $region13: #{tpu_custom_call.1} parent=1 // pred_fallthru
      _
    // Predicated region
    $region14: #{tpu_custom_call.1} parent=1 // pred_check
      _
    $region15: #{tpu_custom_call.1} parent=1 // pred_check_branch
      %34 = sbr.rel (0) target = $region17
    $region16: #{tpu_custom_call.1} parent=1 // pred_region
      %35 = dma.done [#allocation6], 128
    $region17: #{tpu_custom_call.1} parent=1 // pred_fallthru
      _
    %v36 = vld [vmem:[#allocation5] sm:$0xff]
    %38 = vrot.lane.b32.xlu0 %v36, 32
    %v39 = vpop.permute.xlu0 %38
    %vm41 = vcmask 261120
    %v42 = vsel %vm41, %v36, %v39
    %v43 = vld [vmem:[#allocation2] sm:$0xff]
    %v44 = vadd.f32 %v43, %v42
    %vm45 = vcmask 523264
    %46 = vst.msk [vmem:[#allocation7] sm:$0xff] %vm45, %v44
    // Predicated region
    $region18: #{tpu_custom_call.1} parent=1 // pred_check
      _
    $region19: #{tpu_custom_call.1} parent=1 // pred_check_branch
      %48 = sbr.rel (0) target = $region21
    $region20: #{tpu_custom_call.1} parent=1 // pred_region
      %s50 = ssub.s32 128, 128
      %51 = vsyncadd [#allocation4], %s50
      %s53 = sshll.u32 [#allocation7], 4
      %s54 = int_to_ptr.vmem [resolvable:$true] %s53
      %56 = dma.vmem_to_hbm [thread:$0]  %s54, 128, %s2, [#allocation4]
    $region21: #{tpu_custom_call.1} parent=1 // pred_fallthru
      _
    // Predicated region
    $region22: #{tpu_custom_call.1} parent=1 // pred_check
      _
    $region23: #{tpu_custom_call.1} parent=1 // pred_check_branch
      %58 = sbr.rel (0) target = $region25
    $region24: #{tpu_custom_call.1} parent=1 // pred_region
      %59 = dma.done [#allocation4], 128
    $region25: #{tpu_custom_call.1} parent=1 // pred_fallthru
      _
    %60 = vsyncpa [#allocation3], 1
    %61 = vsyncpa [#allocation6], 1
    %62 = vsyncpa [#allocation4], 1

</llo_original>
